<compile_context>
chip_gen: v6e
topology: v6e:2x2x1
jax: 0.10.0
libtpu: 0.0.40
codegen_flags: <defaults>
</compile_context>

<pallas_src>
import functools

import jax
import jax.numpy as jnp
from jax.experimental import pallas as pl
from jax.experimental.pallas import tpu as pltpu  # noqa: F401  (TPU backend)

LANE = 128      # lane width of a vreg (fast axis)
SUBLANE = 8     # f32 sublane count


def _round_up(n, m):
    return ((n + m - 1) // m) * m


# ----------------------------------------------------------------------------
# Fused kernel: all hidden layers + concatenated (mu | log_var) head.
# ----------------------------------------------------------------------------
def _encoder_fused_kernel(*refs, num_hidden, activation):
    """refs = (x, w0, b0, w1, b1, ..., w_head, b_head, out).

    Everything lives in VMEM as a single full-array block; the running
    activation h stays in vregs/VMEM across all layers (no HBM round-trips).
    """
    x_ref = refs[0]
    out_ref = refs[-1]
    p = refs[1:-1]

    h = x_ref[...]
    for i in range(num_hidden):
        w = p[2 * i][...]
        b = p[2 * i + 1][...]                     # (1, hid_p), broadcast over rows
        h = jnp.dot(h, w, preferred_element_type=jnp.float32) + b
        if activation == "lrelu":
            h = jnp.where(h >= 0.0, h, 0.2 * h)   # LeakyReLU(0.2), f32 VPU path
        else:
            h = jnp.maximum(h, 0.0)               # ReLU

    w_head = p[2 * num_hidden][...]               # (hid_p, head_p) = [mu | log_var]
    b_head = p[2 * num_hidden + 1][...]           # (1, head_p)
    y = jnp.dot(h, w_head, preferred_element_type=jnp.float32) + b_head
    out_ref[...] = y.astype(out_ref.dtype)


# ----------------------------------------------------------------------------
# Wrapper: pad to lane-dense shapes, run one pallas_call, slice results.
# ----------------------------------------------------------------------------
def encoder_forward(params, x, activation="lrelu"):
    """Matches Encoder.forward: hidden layers with activation, then mu / log_var."""
    B, input_dim = x.shape
    layers = params["layers"]
    mu_w, mu_b = params["mu"]
    lv_w, lv_b = params["log_var"]
    layer_dim, latent_dim = mu_w.shape
    num_hidden = len(layers)

    # Padded (lane/sublane-dense) sizes.
    B_p = _round_up(B, SUBLANE)
    in_p = _round_up(input_dim, LANE)
    hid_p = _round_up(layer_dim, LANE)
    head_out = 2 * latent_dim                     # mu | log_var fused
    head_p = _round_up(head_out, LANE)

    def pad2(a, rows, cols):
        return jnp.pad(a, ((0, rows - a.shape[0]), (0, cols - a.shape[1])))

    kernel_args = []
    in_specs = []
    flops = 0
    bytes_accessed = 0

    x_p = pad2(x, B_p, in_p)
    kernel_args.append(x_p)
    in_specs.append(pl.BlockSpec(x_p.shape, lambda: (0, 0)))
    bytes_accessed += x_p.size * 4

    prev_p = in_p
    for (w, b) in layers:
        w_p = pad2(w, prev_p, hid_p)
        b_p = pad2(b.reshape(1, -1), 1, hid_p)
        kernel_args += [w_p, b_p]
        in_specs += [pl.BlockSpec(w_p.shape, lambda: (0, 0)),
                     pl.BlockSpec(b_p.shape, lambda: (0, 0))]
        flops += 2 * B_p * prev_p * hid_p
        bytes_accessed += (w_p.size + b_p.size) * 4
        prev_p = hid_p

    # Fused (mu | log_var) head: one matmul instead of two tiny ones.
    w_head = jnp.concatenate([mu_w, lv_w], axis=1)          # (layer_dim, 2*latent)
    b_head = jnp.concatenate([mu_b, lv_b], axis=0).reshape(1, -1)
    w_head_p = pad2(w_head, hid_p, head_p)
    b_head_p = pad2(b_head, 1, head_p)
    kernel_args += [w_head_p, b_head_p]
    in_specs += [pl.BlockSpec(w_head_p.shape, lambda: (0, 0)),
                 pl.BlockSpec(b_head_p.shape, lambda: (0, 0))]
    flops += 2 * B_p * hid_p * head_p
    bytes_accessed += (w_head_p.size + b_head_p.size) * 4
    bytes_accessed += B_p * head_p * 4                        # output writeback

    kernel = functools.partial(
        _encoder_fused_kernel, num_hidden=num_hidden, activation=activation)

    out_p = pl.pallas_call(
        kernel,
        out_shape=jax.ShapeDtypeStruct((B_p, head_p), jnp.float32),
        in_specs=in_specs,
        out_specs=pl.BlockSpec((B_p, head_p), lambda: (0, 0)),
        cost_estimate=pl.CostEstimate(
            flops=flops, transcendentals=0, bytes_accessed=bytes_accessed),
    )(*kernel_args)

    mu = out_p[:B, :latent_dim]
    log_var = out_p[:B, latent_dim:head_out]
    return mu, log_var


# ----------------------------------------------------------------------------
# Parameters (PyTorch nn.Linear-style uniform init, weights pre-transposed).
# ----------------------------------------------------------------------------
def init_encoder_params(key, input_dim, layer_dim, latent_dim, num_layers):
    params = {"layers": []}
    dims_in = [input_dim] + [layer_dim] * (num_layers - 2)
    for d_in in dims_in:
        key, kw, kb = jax.random.split(key, 3)
        bound = 1.0 / jnp.sqrt(d_in)
        w = jax.random.uniform(kw, (d_in, layer_dim), jnp.float32, -bound, bound)
        b = jax.random.uniform(kb, (layer_dim,), jnp.float32, -bound, bound)
        params["layers"].append((w, b))
    for name in ("mu", "log_var"):
        key, kw, kb = jax.random.split(key, 3)
        bound = 1.0 / jnp.sqrt(layer_dim)
        w = jax.random.uniform(kw, (layer_dim, latent_dim), jnp.float32, -bound, bound)
        b = jax.random.uniform(kb, (latent_dim,), jnp.float32, -bound, bound)
        params[name] = (w, b)
    return params


# ----------------------------------------------------------------------------
# Pure-JAX reference for correctness check.
# ----------------------------------------------------------------------------
def encoder_forward_ref(params, x, activation="lrelu"):
    def act(y):
        if activation == "lrelu":
            return jnp.where(y >= 0.0, y, 0.2 * y)
        return jnp.maximum(y, 0.0)

    h = x
    for (w, b) in params["layers"]:
        h = act(h @ w + b)
    mu = h @ params["mu"][0] + params["mu"][1]
    log_var = h @ params["log_var"][0] + params["log_var"][1]
    return mu, log_var


if __name__ == "__main__":
    # Small, module-consistent sizes.
    batch = 8
    input_dim = 32
    layer_dim = 64
    latent_dim = 16
    num_layers = 3          # => 2 hidden Linear layers + mu/log_var heads
    activation = "lrelu"

    key = jax.random.PRNGKey(0)
    key, kx = jax.random.split(key)
    x = jax.random.normal(kx, (batch, input_dim), jnp.float32)

    params = init_encoder_params(key, input_dim, layer_dim, latent_dim, num_layers)

    fwd = jax.jit(lambda p, xx: encoder_forward(p, xx, activation=activation))
    mu, log_var = fwd(params, x)
    mu = jax.block_until_ready(mu)
    log_var = jax.block_until_ready(log_var)

    mu_ref, lv_ref = encoder_forward_ref(params, x, activation)
    assert jnp.allclose(mu, mu_ref, atol=1e-5, rtol=1e-5)
    assert jnp.allclose(log_var, lv_ref, atol=1e-5, rtol=1e-5)

    print("KERNEL_OK")
</pallas_src>

<mosaic_0001>
module attributes {stable_mosaic.version = 11 : i64} {
  func.func @_encoder_fused_kernel(%arg0: memref<8x128xf32, #tpu.memory_space<vmem>>, %arg1: memref<128x128xf32, #tpu.memory_space<vmem>>, %arg2: memref<1x128xf32, #tpu.memory_space<vmem>>, %arg3: memref<128x128xf32, #tpu.memory_space<vmem>>, %arg4: memref<1x128xf32, #tpu.memory_space<vmem>>, %arg5: memref<128x128xf32, #tpu.memory_space<vmem>>, %arg6: memref<1x128xf32, #tpu.memory_space<vmem>>, %arg7: memref<8x128xf32, #tpu.memory_space<vmem>>) attributes {dimension_semantics = [], scalar_prefetch = 0 : i64, scratch_operands = 0 : i64, tpu.core_type = #tpu.core_type<tc>} {
    %c0 = arith.constant 0 : index
    %c0_0 = arith.constant 0 : index
    %0 = vector.load %arg0[%c0, %c0_0] : memref<8x128xf32, #tpu.memory_space<vmem>>, vector<8x128xf32>
    %c0_1 = arith.constant 0 : index
    %c0_2 = arith.constant 0 : index
    %1 = vector.load %arg1[%c0_1, %c0_2] : memref<128x128xf32, #tpu.memory_space<vmem>>, vector<128x128xf32>
    %c0_3 = arith.constant 0 : index
    %c0_4 = arith.constant 0 : index
    %2 = vector.load %arg2[%c0_3, %c0_4] : memref<1x128xf32, #tpu.memory_space<vmem>>, vector<1x128xf32>
    %cst = arith.constant dense<0.000000e+00> : vector<8x128xf32>
    %3 = tpu.matmul %0, %1, %cst {dimension_numbers = #tpu.dot_dimension_numbers<[1], [0], [0], [1], [0, 0, 1, 1], [], []>} : vector<8x128xf32>, vector<128x128xf32>, vector<8x128xf32> -> vector<8x128xf32>
    %4 = vector.broadcast %2 : vector<1x128xf32> to vector<8x128xf32>
    %5 = arith.addf %3, %4 : vector<8x128xf32>
    %cst_5 = arith.constant 0.000000e+00 : f32
    %6 = vector.broadcast %cst_5 : f32 to vector<8x128xf32>
    %7 = arith.cmpf oge, %5, %6 : vector<8x128xf32>
    %cst_6 = arith.constant 2.000000e-01 : f32
    %8 = vector.broadcast %cst_6 : f32 to vector<8x128xf32>
    %9 = arith.mulf %8, %5 : vector<8x128xf32>
    %10 = arith.select %7, %5, %9 : vector<8x128xi1>, vector<8x128xf32>
    %c0_7 = arith.constant 0 : index
    %c0_8 = arith.constant 0 : index
    %11 = vector.load %arg3[%c0_7, %c0_8] : memref<128x128xf32, #tpu.memory_space<vmem>>, vector<128x128xf32>
    %c0_9 = arith.constant 0 : index
    %c0_10 = arith.constant 0 : index
    %12 = vector.load %arg4[%c0_9, %c0_10] : memref<1x128xf32, #tpu.memory_space<vmem>>, vector<1x128xf32>
    %cst_11 = arith.constant dense<0.000000e+00> : vector<8x128xf32>
    %13 = tpu.matmul %10, %11, %cst_11 {dimension_numbers = #tpu.dot_dimension_numbers<[1], [0], [0], [1], [0, 0, 1, 1], [], []>} : vector<8x128xf32>, vector<128x128xf32>, vector<8x128xf32> -> vector<8x128xf32>
    %14 = vector.broadcast %12 : vector<1x128xf32> to vector<8x128xf32>
    %15 = arith.addf %13, %14 : vector<8x128xf32>
    %cst_12 = arith.constant 0.000000e+00 : f32
    %16 = vector.broadcast %cst_12 : f32 to vector<8x128xf32>
    %17 = arith.cmpf oge, %15, %16 : vector<8x128xf32>
    %cst_13 = arith.constant 2.000000e-01 : f32
    %18 = vector.broadcast %cst_13 : f32 to vector<8x128xf32>
    %19 = arith.mulf %18, %15 : vector<8x128xf32>
    %20 = arith.select %17, %15, %19 : vector<8x128xi1>, vector<8x128xf32>
    %c0_14 = arith.constant 0 : index
    %c0_15 = arith.constant 0 : index
    %21 = vector.load %arg5[%c0_14, %c0_15] : memref<128x128xf32, #tpu.memory_space<vmem>>, vector<128x128xf32>
    %c0_16 = arith.constant 0 : index
    %c0_17 = arith.constant 0 : index
    %22 = vector.load %arg6[%c0_16, %c0_17] : memref<1x128xf32, #tpu.memory_space<vmem>>, vector<1x128xf32>
    %cst_18 = arith.constant dense<0.000000e+00> : vector<8x128xf32>
    %23 = tpu.matmul %20, %21, %cst_18 {dimension_numbers = #tpu.dot_dimension_numbers<[1], [0], [0], [1], [0, 0, 1, 1], [], []>} : vector<8x128xf32>, vector<128x128xf32>, vector<8x128xf32> -> vector<8x128xf32>
    %24 = vector.broadcast %22 : vector<1x128xf32> to vector<8x128xf32>
    %25 = arith.addf %23, %24 : vector<8x128xf32>
    %c0_19 = arith.constant 0 : index
    %c0_20 = arith.constant 0 : index
    %26 = vector.load %arg7[%c0_19, %c0_20] : memref<8x128xf32, #tpu.memory_space<vmem>>, vector<8x128xf32>
    tpu.vector_store %arg7[%c0_19, %c0_20], %25 {strides = array<i32>} : memref<8x128xf32, #tpu.memory_space<vmem>>, vector<8x128xf32>,
    return
  }
}

</mosaic_0001>

<llo_original>
// kernel: _lambda_.1
$region0: #{_lambda_.1}
  #allocation0 [shape = 'u32[]', space=smem, size = 0x4, offset = 0x4, fixed_abs, tag = 'smem constant byte address 0x4 - core index']
  #allocation1 [shape = 'u32[144,128]{1,0:T(1,128)}', space=vmem, size = 0x12000, scoped, tag = 'internal scratch']
  %s0 = inlined_call_operand.vmem [shape: f32[8,128], index: 0, kind: input, shape index: {}]
  %s1 = inlined_call_operand.vmem [shape: f32[128,128], index: 1, kind: input, shape index: {}]
  %s2 = inlined_call_operand.vmem [shape: f32[1,128], index: 2, kind: input, shape index: {}]
  %s3 = inlined_call_operand.vmem [shape: f32[128,128], index: 3, kind: input, shape index: {}]
  %s4 = inlined_call_operand.vmem [shape: f32[1,128], index: 4, kind: input, shape index: {}]
  %s5 = inlined_call_operand.vmem [shape: f32[128,128], index: 5, kind: input, shape index: {}]
  %s6 = inlined_call_operand.vmem [shape: f32[1,128], index: 6, kind: input, shape index: {}]
  %s7 = inlined_call_operand.vmem [shape: f32[8,128], index: 7, kind: output, shape index: {}]
  %s8 = sld [smem:[#allocation0]]
  $region38: #{_lambda_.1} parent=0
    _
  %s10 = ssub.s32 1, %s8
  %s11 = scalar_select 0, %s10, %s8
  // Predicated region
  $region2: #{_lambda_.1} parent=0 // pred_check
    _
  $region3: #{_lambda_.1} parent=0 // pred_check_branch
    %13 = sbr.rel (0) target = $region5
  $region4: #{_lambda_.1} parent=0 // pred_region
    _
  $region5: #{_lambda_.1} parent=0 // pred_fallthru
    _
  // Predicated region
  $region6: #{_lambda_.1} parent=0 // pred_check
    _
  $region7: #{_lambda_.1} parent=0 // pred_check_branch
    %15 = sbr.rel (0) target = $region9
  $region8: #{_lambda_.1} parent=0 // pred_region
    _
  $region9: #{_lambda_.1} parent=0 // pred_fallthru
    _
  // Predicated region
  $region10: #{_lambda_.1} parent=0 // pred_check
    _
  $region11: #{_lambda_.1} parent=0 // pred_check_branch
    %17 = sbr.rel (0) target = $region13
  $region12: #{_lambda_.1} parent=0 // pred_region
    _
  $region13: #{_lambda_.1} parent=0 // pred_fallthru
    _
  // Predicated region
  $region14: #{_lambda_.1} parent=0 // pred_check
    _
  $region15: #{_lambda_.1} parent=0 // pred_check_branch
    %19 = sbr.rel (0) target = $region17
  $region16: #{_lambda_.1} parent=0 // pred_region
    _
  $region17: #{_lambda_.1} parent=0 // pred_fallthru
    _
  // Predicated region
  $region18: #{_lambda_.1} parent=0 // pred_check
    _
  $region19: #{_lambda_.1} parent=0 // pred_check_branch
    %21 = sbr.rel (0) target = $region21
  $region20: #{_lambda_.1} parent=0 // pred_region
    _
  $region21: #{_lambda_.1} parent=0 // pred_fallthru
    _
  // Predicated region
  $region22: #{_lambda_.1} parent=0 // pred_check
    _
  $region23: #{_lambda_.1} parent=0 // pred_check_branch
    %23 = sbr.rel (0) target = $region25
  $region24: #{_lambda_.1} parent=0 // pred_region
    _
  $region25: #{_lambda_.1} parent=0 // pred_fallthru
    _
  // Predicated region
  $region26: #{_lambda_.1} parent=0 // pred_check
    _
  $region27: #{_lambda_.1} parent=0 // pred_check_branch
    %25 = sbr.rel (0) target = $region29
  $region28: #{_lambda_.1} parent=0 // pred_region
    _
  $region29: #{_lambda_.1} parent=0 // pred_fallthru
    _
  %v26 = vld [vmem:[%s0] sm:$0xff]
  %v27 = vld [vmem:[%s1] sm:$0xff]
  %v28 = vld [vmem:[%s1 + $0x8] sm:$0xff]
  %v29 = vld [vmem:[%s1 + $0x10] sm:$0xff]
  %v30 = vld [vmem:[%s1 + $0x18] sm:$0xff]
  %v31 = vld [vmem:[%s1 + $0x20] sm:$0xff]
  %v32 = vld [vmem:[%s1 + $0x28] sm:$0xff]
  %v33 = vld [vmem:[%s1 + $0x30] sm:$0xff]
  %v34 = vld [vmem:[%s1 + $0x38] sm:$0xff]
  %v35 = vld [vmem:[%s1 + $0x40] sm:$0xff]
  %v36 = vld [vmem:[%s1 + $0x48] sm:$0xff]
  %v37 = vld [vmem:[%s1 + $0x50] sm:$0xff]
  %v38 = vld [vmem:[%s1 + $0x58] sm:$0xff]
  %v39 = vld [vmem:[%s1 + $0x60] sm:$0xff]
  %v40 = vld [vmem:[%s1 + $0x68] sm:$0xff]
  %v41 = vld [vmem:[%s1 + $0x70] sm:$0xff]
  %v42 = vld [vmem:[%s1 + $0x78] sm:$0xff]
  %v43 = vld [vmem:[%s2] sm:$0x1]
  %v45 = vlaneseq
  %v46 = vshrl.u32 %v45, 7
  %v47 = vsub.s32 0, %v46
  %v48 = vrot.slane %v43, %v47
  %50 = vmatprep.subr.mxu0 0.0
  %51 = vmatpush1.msra.mxu0 %v42
  %52 = vmatprep.subr.mxu0 0.0
  %53 = vmatpush1.msra.mxu0 %v41
  %54 = vmatprep.subr.mxu0 0.0
  %55 = vmatpush1.msra.mxu0 %v40
  %56 = vmatprep.subr.mxu0 0.0
  %57 = vmatpush1.msra.mxu0 %v39
  %58 = vmatprep.subr.mxu0 0.0
  %59 = vmatpush1.msra.mxu0 %v38
  %60 = vmatprep.subr.mxu0 0.0
  %61 = vmatpush1.msra.mxu0 %v37
  %62 = vmatprep.subr.mxu0 0.0
  %63 = vmatpush1.msra.mxu0 %v36
  %64 = vmatprep.subr.mxu0 0.0
  %65 = vmatpush1.msra.mxu0 %v35
  %66 = vmatprep.subr.mxu0 0.0
  %67 = vmatpush1.msra.mxu0 %v34
  %68 = vmatprep.subr.mxu0 0.0
  %69 = vmatpush1.msra.mxu0 %v33
  %70 = vmatprep.subr.mxu0 0.0
  %71 = vmatpush1.msra.mxu0 %v32
  %72 = vmatprep.subr.mxu0 0.0
  %73 = vmatpush1.msra.mxu0 %v31
  %74 = vmatprep.subr.mxu0 0.0
  %75 = vmatpush1.msra.mxu0 %v30
  %76 = vmatprep.subr.mxu0 0.0
  %77 = vmatpush1.msra.mxu0 %v29
  %78 = vmatprep.subr.mxu0 0.0
  %79 = vmatpush1.msra.mxu0 %v28
  %80 = vmatprep.subr.mxu0 0.0
  %81 = vmatpush1.msra.mxu0 %v27
  %82 = vmatprep.subr.mxu0 0.0
  %83 = vmatpush2.msra.mxu0 0.0
  %84 = vmatprep.subr.mxu0 0.0
  %85 = vmatpush2.msra.mxu0 0.0
  %86 = vmatprep.subr.mxu0 0.0
  %87 = vmatpush2.msra.mxu0 0.0
  %88 = vmatprep.subr.mxu0 0.0
  %89 = vmatpush2.msra.mxu0 0.0
  %90 = vmatprep.subr.mxu0 0.0
  %91 = vmatpush2.msra.mxu0 0.0
  %92 = vmatprep.subr.mxu0 0.0
  %93 = vmatpush2.msra.mxu0 0.0
  %94 = vmatprep.subr.mxu0 0.0
  %95 = vmatpush2.msra.mxu0 0.0
  %96 = vmatprep.subr.mxu0 0.0
  %97 = vmatpush2.msra.mxu0 0.0
  %98 = vmatprep.subr.mxu0 0.0
  %99 = vmatpush2.msra.mxu0 0.0
  %100 = vmatprep.subr.mxu0 0.0
  %101 = vmatpush2.msra.mxu0 0.0
  %102 = vmatprep.subr.mxu0 0.0
  %103 = vmatpush2.msra.mxu0 0.0
  %104 = vmatprep.subr.mxu0 0.0
  %105 = vmatpush2.msra.mxu0 0.0
  %106 = vmatprep.subr.mxu0 0.0
  %107 = vmatpush2.msra.mxu0 0.0
  %108 = vmatprep.subr.mxu0 0.0
  %109 = vmatpush2.msra.mxu0 0.0
  %110 = vmatprep.subr.mxu0 0.0
  %111 = vmatpush2.msra.mxu0 0.0
  %112 = vmatprep.subr.mxu0 0.0
  %113 = vmatpush2.msra.mxu0 0.0
  %114 = vmatprep.mubr.f32.mxu0 0.0
  %115 = vmatmul.mubr.f32.gmra.mxu0 %v26
  %v116 = vpop.f32.mrf.mxu0
  %v117 = vadd.f32 %v48, %v116
  %v118 = vpop.f32.mrf.mxu0
  %119 = vdwg.mxu0
  %vm120 = vcmp.ge.f32.partialorder %v117, 0.0
  %v121 = vmul.f32 %v117, 0.2
  %v122 = vsel %vm120, %v117, %v121
  %v123 = vld [vmem:[%s3] sm:$0xff]
  %v124 = vld [vmem:[%s3 + $0x8] sm:$0xff]
  %v125 = vld [vmem:[%s3 + $0x10] sm:$0xff]
  %v126 = vld [vmem:[%s3 + $0x18] sm:$0xff]
  %v127 = vld [vmem:[%s3 + $0x20] sm:$0xff]
  %v128 = vld [vmem:[%s3 + $0x28] sm:$0xff]
  %v129 = vld [vmem:[%s3 + $0x30] sm:$0xff]
  %v130 = vld [vmem:[%s3 + $0x38] sm:$0xff]
  %v131 = vld [vmem:[%s3 + $0x40] sm:$0xff]
  %v132 = vld [vmem:[%s3 + $0x48] sm:$0xff]
  %v133 = vld [vmem:[%s3 + $0x50] sm:$0xff]
  %v134 = vld [vmem:[%s3 + $0x58] sm:$0xff]
  %v135 = vld [vmem:[%s3 + $0x60] sm:$0xff]
  %v136 = vld [vmem:[%s3 + $0x68] sm:$0xff]
  %v137 = vld [vmem:[%s3 + $0x70] sm:$0xff]
  %v138 = vld [vmem:[%s3 + $0x78] sm:$0xff]
  %v139 = vld [vmem:[%s4] sm:$0x1]
  %v141 = vlaneseq
  %v142 = vshrl.u32 %v141, 7
  %v143 = vsub.s32 0, %v142
  %v144 = vrot.slane %v139, %v143
  %146 = vmatprep.subr.mxu0 0.0
  %147 = vmatpush1.msra.mxu0 %v138
  %148 = vmatprep.subr.mxu0 0.0
  %149 = vmatpush1.msra.mxu0 %v137
  %150 = vmatprep.subr.mxu0 0.0
  %151 = vmatpush1.msra.mxu0 %v136
  %152 = vmatprep.subr.mxu0 0.0
  %153 = vmatpush1.msra.mxu0 %v135
  %154 = vmatprep.subr.mxu0 0.0
  %155 = vmatpush1.msra.mxu0 %v134
  %156 = vmatprep.subr.mxu0 0.0
  %157 = vmatpush1.msra.mxu0 %v133
  %158 = vmatprep.subr.mxu0 0.0
  %159 = vmatpush1.msra.mxu0 %v132
  %160 = vmatprep.subr.mxu0 0.0
  %161 = vmatpush1.msra.mxu0 %v131
  %162 = vmatprep.subr.mxu0 0.0
  %163 = vmatpush1.msra.mxu0 %v130
  %164 = vmatprep.subr.mxu0 0.0
  %165 = vmatpush1.msra.mxu0 %v129
  %166 = vmatprep.subr.mxu0 0.0
  %167 = vmatpush1.msra.mxu0 %v128
  %168 = vmatprep.subr.mxu0 0.0
  %169 = vmatpush1.msra.mxu0 %v127
  %170 = vmatprep.subr.mxu0 0.0
  %171 = vmatpush1.msra.mxu0 %v126
  %172 = vmatprep.subr.mxu0 0.0
  %173 = vmatpush1.msra.mxu0 %v125
  %174 = vmatprep.subr.mxu0 0.0
  %175 = vmatpush1.msra.mxu0 %v124
  %176 = vmatprep.subr.mxu0 0.0
  %177 = vmatpush1.msra.mxu0 %v123
  %178 = vmatprep.subr.mxu0 0.0
  %179 = vmatpush2.msra.mxu0 0.0
  %180 = vmatprep.subr.mxu0 0.0
  %181 = vmatpush2.msra.mxu0 0.0
  %182 = vmatprep.subr.mxu0 0.0
  %183 = vmatpush2.msra.mxu0 0.0
  %184 = vmatprep.subr.mxu0 0.0
  %185 = vmatpush2.msra.mxu0 0.0
  %186 = vmatprep.subr.mxu0 0.0
  %187 = vmatpush2.msra.mxu0 0.0
  %188 = vmatprep.subr.mxu0 0.0
  %189 = vmatpush2.msra.mxu0 0.0
  %190 = vmatprep.subr.mxu0 0.0
  %191 = vmatpush2.msra.mxu0 0.0
  %192 = vmatprep.subr.mxu0 0.0
  %193 = vmatpush2.msra.mxu0 0.0
  %194 = vmatprep.subr.mxu0 0.0
  %195 = vmatpush2.msra.mxu0 0.0
  %196 = vmatprep.subr.mxu0 0.0
  %197 = vmatpush2.msra.mxu0 0.0
  %198 = vmatprep.subr.mxu0 0.0
  %199 = vmatpush2.msra.mxu0 0.0
  %200 = vmatprep.subr.mxu0 0.0
  %201 = vmatpush2.msra.mxu0 0.0
  %202 = vmatprep.subr.mxu0 0.0
  %203 = vmatpush2.msra.mxu0 0.0
  %204 = vmatprep.subr.mxu0 0.0
  %205 = vmatpush2.msra.mxu0 0.0
  %206 = vmatprep.subr.mxu0 0.0
  %207 = vmatpush2.msra.mxu0 0.0
  %208 = vmatprep.subr.mxu0 0.0
  %209 = vmatpush2.msra.mxu0 0.0
  %210 = vmatprep.mubr.f32.mxu0 0.0
  %211 = vmatmul.mubr.f32.gmra.mxu0 %v122
  %v212 = vpop.f32.mrf.mxu0
  %v213 = vadd.f32 %v144, %v212
  %v214 = vpop.f32.mrf.mxu0
  %215 = vdwg.mxu0
  %vm216 = vcmp.ge.f32.partialorder %v213, 0.0
  %v217 = vmul.f32 %v213, 0.2
  %v218 = vsel %vm216, %v213, %v217
  %v219 = vld [vmem:[%s5] sm:$0xff]
  %v220 = vld [vmem:[%s5 + $0x8] sm:$0xff]
  %v221 = vld [vmem:[%s5 + $0x10] sm:$0xff]
  %v222 = vld [vmem:[%s5 + $0x18] sm:$0xff]
  %v223 = vld [vmem:[%s5 + $0x20] sm:$0xff]
  %v224 = vld [vmem:[%s5 + $0x28] sm:$0xff]
  %v225 = vld [vmem:[%s5 + $0x30] sm:$0xff]
  %v226 = vld [vmem:[%s5 + $0x38] sm:$0xff]
  %v227 = vld [vmem:[%s5 + $0x40] sm:$0xff]
  %v228 = vld [vmem:[%s5 + $0x48] sm:$0xff]
  %v229 = vld [vmem:[%s5 + $0x50] sm:$0xff]
  %v230 = vld [vmem:[%s5 + $0x58] sm:$0xff]
  %v231 = vld [vmem:[%s5 + $0x60] sm:$0xff]
  %v232 = vld [vmem:[%s5 + $0x68] sm:$0xff]
  %v233 = vld [vmem:[%s5 + $0x70] sm:$0xff]
  %v234 = vld [vmem:[%s5 + $0x78] sm:$0xff]
  %v235 = vld [vmem:[%s6] sm:$0x1]
  %v237 = vlaneseq
  %v238 = vshrl.u32 %v237, 7
  %v239 = vsub.s32 0, %v238
  %v240 = vrot.slane %v235, %v239
  %242 = vmatprep.subr.mxu0 0.0
  %243 = vmatpush1.msra.mxu0 %v234
  %244 = vmatprep.subr.mxu0 0.0
  %245 = vmatpush1.msra.mxu0 %v233
  %246 = vmatprep.subr.mxu0 0.0
  %247 = vmatpush1.msra.mxu0 %v232
  %248 = vmatprep.subr.mxu0 0.0
  %249 = vmatpush1.msra.mxu0 %v231
  %250 = vmatprep.subr.mxu0 0.0
  %251 = vmatpush1.msra.mxu0 %v230
  %252 = vmatprep.subr.mxu0 0.0
  %253 = vmatpush1.msra.mxu0 %v229
  %254 = vmatprep.subr.mxu0 0.0
  %255 = vmatpush1.msra.mxu0 %v228
  %256 = vmatprep.subr.mxu0 0.0
  %257 = vmatpush1.msra.mxu0 %v227
  %258 = vmatprep.subr.mxu0 0.0
  %259 = vmatpush1.msra.mxu0 %v226
  %260 = vmatprep.subr.mxu0 0.0
  %261 = vmatpush1.msra.mxu0 %v225
  %262 = vmatprep.subr.mxu0 0.0
  %263 = vmatpush1.msra.mxu0 %v224
  %264 = vmatprep.subr.mxu0 0.0
  %265 = vmatpush1.msra.mxu0 %v223
  %266 = vmatprep.subr.mxu0 0.0
  %267 = vmatpush1.msra.mxu0 %v222
  %268 = vmatprep.subr.mxu0 0.0
  %269 = vmatpush1.msra.mxu0 %v221
  %270 = vmatprep.subr.mxu0 0.0
  %271 = vmatpush1.msra.mxu0 %v220
  %272 = vmatprep.subr.mxu0 0.0
  %273 = vmatpush1.msra.mxu0 %v219
  %274 = vmatprep.subr.mxu0 0.0
  %275 = vmatpush2.msra.mxu0 0.0
  %276 = vmatprep.subr.mxu0 0.0
  %277 = vmatpush2.msra.mxu0 0.0
  %278 = vmatprep.subr.mxu0 0.0
  %279 = vmatpush2.msra.mxu0 0.0
  %280 = vmatprep.subr.mxu0 0.0
  %281 = vmatpush2.msra.mxu0 0.0
  %282 = vmatprep.subr.mxu0 0.0
  %283 = vmatpush2.msra.mxu0 0.0
  %284 = vmatprep.subr.mxu0 0.0
  %285 = vmatpush2.msra.mxu0 0.0
  %286 = vmatprep.subr.mxu0 0.0
  %287 = vmatpush2.msra.mxu0 0.0
  %288 = vmatprep.subr.mxu0 0.0
  %289 = vmatpush2.msra.mxu0 0.0
  %290 = vmatprep.subr.mxu0 0.0
  %291 = vmatpush2.msra.mxu0 0.0
  %292 = vmatprep.subr.mxu0 0.0
  %293 = vmatpush2.msra.mxu0 0.0
  %294 = vmatprep.subr.mxu0 0.0
  %295 = vmatpush2.msra.mxu0 0.0
  %296 = vmatprep.subr.mxu0 0.0
  %297 = vmatpush2.msra.mxu0 0.0
  %298 = vmatprep.subr.mxu0 0.0
  %299 = vmatpush2.msra.mxu0 0.0
  %300 = vmatprep.subr.mxu0 0.0
  %301 = vmatpush2.msra.mxu0 0.0
  %302 = vmatprep.subr.mxu0 0.0
  %303 = vmatpush2.msra.mxu0 0.0
  %304 = vmatprep.subr.mxu0 0.0
  %305 = vmatpush2.msra.mxu0 0.0
  %306 = vmatprep.mubr.f32.mxu0 0.0
  %307 = vmatmul.mubr.f32.gmra.mxu0 %v218
  %v308 = vpop.f32.mrf.mxu0
  %v309 = vadd.f32 %v240, %v308
  %v310 = vpop.f32.mrf.mxu0
  %311 = vdwg.mxu0
  %312 = vst [vmem:[%s7] sm:$0xff] %v309
  // Predicated region
  $region30: #{_lambda_.1} parent=0 // pred_check
    _
  $region31: #{_lambda_.1} parent=0 // pred_check_branch
    %314 = sbr.rel (0) target = $region33
  $region32: #{_lambda_.1} parent=0 // pred_region
    _
  $region33: #{_lambda_.1} parent=0 // pred_fallthru
    _
  // Predicated region
  $region34: #{_lambda_.1} parent=0 // pred_check
    _
  $region35: #{_lambda_.1} parent=0 // pred_check_branch
    %316 = sbr.rel (0) target = $region37
  $region36: #{_lambda_.1} parent=0 // pred_region
    _
  $region37: #{_lambda_.1} parent=0 // pred_fallthru
    _

</llo_original>
